<compile_context>
chip_gen: v7x
topology: tpu7x:2x2x1
jax: 0.10.0
libtpu: 0.0.40
codegen_flags: <defaults>
</compile_context>

<pallas_src>
import functools

import jax
import jax.numpy as jnp
from jax.experimental import pallas as pl
from jax.experimental.pallas import tpu as pltpu

_LANE_CANDIDATES = (16384, 8192, 4096, 2048, 1024, 512, 256, 128)
_VMEM_LIMIT_BYTES = 32 * 1024 * 1024  # safe on v5e/v6e (128 MiB) and v7x (64 MiB)


# --------------------------------------------------------------------------- #
# Kernel
# --------------------------------------------------------------------------- #
def _ema_update_kernel(x_ref, cur_ref, out_ref, *, decay):
    """Elementwise EMA / decay update: out = decay * cur + (1 - decay) * x.

    Arithmetic is done in f32 (free on this mem-bound path; keeps bf16 state
    numerically clean) and cast back to the state dtype on store.
    """
    x = x_ref[...].astype(jnp.float32)
    c = cur_ref[...].astype(jnp.float32)
    out_ref[...] = (decay * c + (1.0 - decay) * x).astype(out_ref.dtype)


# --------------------------------------------------------------------------- #
# Tiling helpers
# --------------------------------------------------------------------------- #
@functools.lru_cache(maxsize=1)
def _target_tile_bytes() -> int:
    """Per-operand block byte target (4 MiB on v7x, 2 MiB on v5e/v6e)."""
    try:
        kind = jax.devices()[0].device_kind.lower()
    except Exception:  # pragma: no cover - defensive; default to the small tile
        kind = ""
    if "v7" in kind or "7x" in kind:
        return 4 * 1024 * 1024
    return 2 * 1024 * 1024


def _sublane_multiple(itemsize: int) -> int:
    """Packed sublane granularity: 8 rows f32, 16 bf16, 32 int8/fp8."""
    return 8 * max(1, 4 // itemsize)


def _pick_layout(n: int, itemsize: int, target_tile_bytes: int):
    """Choose a lane-dense (rows, lanes) layout and a row block for `n` elements.

    Returns (lanes, rows, row_block) with rows * lanes == n (no padding of the
    HBM arrays), row_block a multiple of the dtype's packed-sublane granularity
    (or the full row extent), and row_block * lanes * itemsize <= target bytes.
    The last grid block may be ragged (handled by Pallas). Returns None if no
    lane-dense layout exists (caller falls back to plain jnp).
    """
    sub = _sublane_multiple(itemsize)
    feasible = []
    for lanes in _LANE_CANDIDATES:
        if n % lanes:
            continue
        rows = n // lanes
        row_cap = (target_tile_bytes // (itemsize * lanes)) // sub * sub
        if row_cap == 0:
            continue  # lanes too wide for the byte target; try narrower
        feasible.append((lanes, rows, row_cap))
    if not feasible:
        return None

    # Prefer the widest lane layout whose row count fills whole packed-sublane
    # tiles; otherwise just take the widest.
    lanes, rows, row_cap = next(
        ((l, r, c) for (l, r, c) in feasible if r % sub == 0), feasible[0]
    )

    if rows <= row_cap:
        if rows >= 2 * sub:
            # Whole array would fit one block: split into two so the 1-D
            # "parallel" grid can shard across v7x's two TensorCores.
            half = ((rows + 1) // 2 + sub - 1) // sub * sub
            return lanes, rows, min(half, rows)
        return lanes, rows, rows  # tiny row count: single full-extent block
    return lanes, rows, row_cap   # multi-block grid; ragged last block is fine


# --------------------------------------------------------------------------- #
# EMA update (jitted wrappers)
# --------------------------------------------------------------------------- #
def _ema_update_impl(x: jax.Array, cur_val: jax.Array, *, decay: float) -> jax.Array:
    orig_shape = x.shape
    n = x.size
    itemsize = jnp.dtype(x.dtype).itemsize
    min_elems = 1024 * max(1, 4 // itemsize)  # ~one vreg worth per dtype

    layout = _pick_layout(n, itemsize, _target_tile_bytes())
    if layout is None or n < min_elems:
        # Tiny or ragged sizes: XLA's fused elementwise already hits the HBM
        # roofline; skip the pallas_call launch + reshape overhead.
        return (decay * cur_val + (1.0 - decay) * x).astype(x.dtype)

    lanes, rows, row_block = layout
    x2 = x.reshape(rows, lanes)
    c2 = cur_val.reshape(rows, lanes)

    kernel = functools.partial(_ema_update_kernel, decay=float(decay))

    out2 = pl.pallas_call(
        kernel,
        out_shape=jax.ShapeDtypeStruct((rows, lanes), x.dtype),
        grid=(pl.cdiv(rows, row_block),),
        in_specs=[
            pl.BlockSpec((row_block, lanes), lambda i: (i, 0)),  # x tile
            pl.BlockSpec((row_block, lanes), lambda i: (i, 0)),  # cur_val tile
        ],
        out_specs=pl.BlockSpec((row_block, lanes), lambda i: (i, 0)),
        # EMA is an in-place update of the persistent state: alias cur_val -> out.
        # With jit-level donation of cur_val this runs truly in place (no
        # defensive copy); without donation XLA inserts a copy and stays correct.
        input_output_aliases={1: 0},
        compiler_params=pltpu.CompilerParams(
            dimension_semantics=("parallel",),      # shard 1-D grid across TCs on v7x
            vmem_limit_bytes=_VMEM_LIMIT_BYTES,     # headroom over the working set
        ),
    )(x2, c2)

    return out2.reshape(orig_shape)


# decay is a static (trace-time) constant: fine for a fixed hyperparameter.
# If decay is scheduled per step, pass it as a traced operand instead to avoid
# recompiles.
_ema_update_jit = jax.jit(_ema_update_impl, static_argnames=("decay",))
_ema_update_jit_donate = jax.jit(
    _ema_update_impl, static_argnames=("decay",), donate_argnums=(1,)
)


def ema_update(
    x: jax.Array, cur_val: jax.Array, decay: float = 0.9, *, donate: bool = False
) -> jax.Array:
    """Pallas-backed update_f: new_val = decay * cur_val + (1 - decay) * x.

    With donate=True the cur_val buffer is donated and the EMA runs fully in
    place (no defensive copy). The caller must not use `cur_val` afterwards.
    """
    assert x.shape == cur_val.shape, "update_f expects matching shapes"
    assert x.dtype == cur_val.dtype, "update_f expects matching dtypes"
    fn = _ema_update_jit_donate if donate else _ema_update_jit
    return fn(x, cur_val, decay=float(decay))


# --------------------------------------------------------------------------- #
# Updater module (JAX/Pallas port of zenkai.nnz._mod.Updater)
# --------------------------------------------------------------------------- #
class Updater:
    """Stateful tensor updater.

    If `donate_state=True`, updates from the second one onward donate the state
    buffer to the kernel (true in-place EMA, no extra HBM copy). In that mode a
    returned value is only a valid snapshot until the next update. The update_f
    must then accept a `donate` keyword (ema_update does).
    """

    def __init__(self, update_f=None, *args, donate_state: bool = False, **kwargs):
        self.update_f = update_f
        self.args = args
        self.kwargs = kwargs
        self.donate_state = donate_state
        self.cur_val = None
        self._owns_state = False  # True once cur_val was produced by update_f

    def __call__(self, x: jax.Array) -> jax.Array:
        if self.cur_val is None:
            self.cur_val = x
            self._owns_state = False  # caller still owns this buffer: never donate it
            return x
        if self.update_f is not None:
            kwargs = dict(self.kwargs)
            if self.donate_state and self._owns_state:
                kwargs["donate"] = True
            self.cur_val = self.update_f(x, self.cur_val, *self.args, **kwargs)
            self._owns_state = True
            return self.cur_val
        return x

    # alias to mirror nn.Module.forward
    forward = __call__


# --------------------------------------------------------------------------- #
# Demo / self-check
# --------------------------------------------------------------------------- #
if __name__ == "__main__":
    key = jax.random.PRNGKey(0)
    k1, k2, k3, k4, k5 = jax.random.split(key, 5)

    # --- Primary demo: small NCHW tensor through the stateful Updater ---------
    N, C, H, W = 2, 4, 16, 16
    x0 = jax.random.normal(k1, (N, C, H, W), dtype=jnp.float32)
    x1 = jax.random.normal(k2, (N, C, H, W), dtype=jnp.float32)
    x2 = jax.random.normal(k3, (N, C, H, W), dtype=jnp.float32)

    decay = 0.9
    updater = Updater(ema_update, decay)  # safe (non-donating) stateful path

    y0 = updater(x0)  # first call: stores x0, returns it, no kernel
    y1 = updater(x1)  # Pallas EMA update
    y2 = updater(x2)  # Pallas EMA update
    jax.block_until_ready(y2)

    ref1 = decay * x0 + (1.0 - decay) * x1
    ref2 = decay * ref1 + (1.0 - decay) * x2

    assert y0.shape == (N, C, H, W) and y0.dtype == jnp.float32
    assert jnp.allclose(y0, x0)
    assert jnp.allclose(y1, ref1, atol=1e-6, rtol=1e-6)
    assert jnp.allclose(y2, ref2, atol=1e-6, rtol=1e-6)

    # Updater with no update_f: identity behavior on every call.
    ident = Updater(None)
    assert jnp.allclose(ident(x0), x0)
    assert jnp.allclose(ident(x1), x1)

    # --- bf16 path: exercises the dtype-aware (16-row) sublane blocking -------
    xbf = jax.random.normal(k4, (4, 8, 32, 32), dtype=jnp.bfloat16)
    cbf = jax.random.normal(k5, (4, 8, 32, 32), dtype=jnp.bfloat16)
    obf = ema_update(xbf, cbf, 0.9)
    jax.block_until_ready(obf)
    refbf = (0.9 * cbf.astype(jnp.float32) + 0.1 * xbf.astype(jnp.float32)).astype(
        jnp.bfloat16
    )
    assert jnp.allclose(
        obf.astype(jnp.float32), refbf.astype(jnp.float32), atol=2e-2, rtol=2e-2
    )

    # --- Larger tensor: multi-block grid + donated (truly in-place) update ----
    xb = jax.random.normal(k4, (8, 32, 64, 64), dtype=jnp.float32)  # 4 MiB f32
    cb = jax.random.normal(k5, (8, 32, 64, 64), dtype=jnp.float32)
    ref_b = 0.95 * cb + 0.05 * xb          # reference computed BEFORE donating cb
    ob = ema_update(xb, cb, 0.95, donate=True)
    jax.block_until_ready(ob)
    assert jnp.allclose(ob, ref_b, atol=1e-6, rtol=1e-6)
    # NOTE: cb must not be used past this point -- its buffer was donated.

    print("KERNEL_OK")
</pallas_src>

<mosaic_0001>
module attributes {stable_mosaic.version = 11 : i64} {
  func.func @_ema_update_kernel(%arg0: i32, %arg1: memref<8x256xf32, #tpu.memory_space<vmem>>, %arg2: memref<8x256xf32, #tpu.memory_space<vmem>>, %arg3: memref<8x256xf32, #tpu.memory_space<vmem>>) attributes {dimension_semantics = [#tpu.dimension_semantics<parallel>], iteration_bounds = array<i64: 1>, scalar_prefetch = 0 : i64, scratch_operands = 0 : i64, tpu.core_type = #tpu.core_type<tc>, window_params = [{transform_indices = @transform_0, window_bounds = array<i64: 8, 256>}, {transform_indices = @transform_1, window_bounds = array<i64: 8, 256>}, {transform_indices = @transform_2, window_bounds = array<i64: 8, 256>}]} {
    %c0 = arith.constant 0 : index
    %c0_0 = arith.constant 0 : index
    %0 = vector.load %arg1[%c0, %c0_0] : memref<8x256xf32, #tpu.memory_space<vmem>>, vector<8x256xf32>
    %c0_1 = arith.constant 0 : index
    %c0_2 = arith.constant 0 : index
    %1 = vector.load %arg2[%c0_1, %c0_2] : memref<8x256xf32, #tpu.memory_space<vmem>>, vector<8x256xf32>
    %cst = arith.constant 0.899999976 : f32
    %2 = vector.broadcast %cst : f32 to vector<8x256xf32>
    %3 = arith.mulf %2, %1 : vector<8x256xf32>
    %cst_3 = arith.constant 1.000000e-01 : f32
    %4 = vector.broadcast %cst_3 : f32 to vector<8x256xf32>
    %5 = arith.mulf %4, %0 : vector<8x256xf32>
    %6 = arith.addf %3, %5 : vector<8x256xf32>
    %c0_4 = arith.constant 0 : index
    %c0_5 = arith.constant 0 : index
    %7 = vector.load %arg3[%c0_4, %c0_5] : memref<8x256xf32, #tpu.memory_space<vmem>>, vector<8x256xf32>
    tpu.vector_store %arg3[%c0_4, %c0_5], %6 {strides = array<i32>} : memref<8x256xf32, #tpu.memory_space<vmem>>, vector<8x256xf32>,
    return
  }
  func.func @transform_0(%arg0: i32) -> (i32, i32) {
    %c0_i32 = arith.constant 0 : i32
    %c0_i32_0 = arith.constant 0 : i32
    return %arg0, %c0_i32 : i32, i32
  }
  func.func @transform_1(%arg0: i32) -> (i32, i32) {
    %c0_i32 = arith.constant 0 : i32
    %c0_i32_0 = arith.constant 0 : i32
    return %arg0, %c0_i32 : i32, i32
  }
  func.func @transform_2(%arg0: i32) -> (i32, i32) {
    %c0_i32 = arith.constant 0 : i32
    %c0_i32_0 = arith.constant 0 : i32
    return %arg0, %c0_i32 : i32, i32
  }
}

</mosaic_0001>

<llo_original>
// kernel: _ema_update_impl.1
$region0: #{_ema_update_impl.1}
  #allocation0 [shape = 'u32[]', space=smem, size = 0x4, offset = 0x4, fixed_abs, tag = 'smem constant byte address 0x4 - core index']
  #allocation1 [shape = 'u32[144,128]{1,0:T(1,128)}', space=vmem, size = 0x12000, scoped, tag = 'internal scratch']
  %s0 = inlined_call_operand.vmem [shape: f32[8,256], index: 0, kind: input, shape index: {}]
  %s1 = inlined_call_operand.vmem [shape: f32[8,256], index: 1, kind: input, shape index: {}, may-alias: {1,2}]
  %s2 = inlined_call_operand.vmem [shape: f32[8,256], index: 2, kind: output, shape index: {}, may-alias: {1,2}]
  %s3 = sld [smem:[#allocation0]]
  $region18: #{_ema_update_impl.1} parent=0
    _
  %s5 = ssub.s32 1, %s3
  %s6 = scalar_select 0, %s5, %s3
  // Predicated region
  $region2: #{_ema_update_impl.1} parent=0 // pred_check
    _
  $region3: #{_ema_update_impl.1} parent=0 // pred_check_branch
    %8 = sbr.rel (0) target = $region5
  $region4: #{_ema_update_impl.1} parent=0 // pred_region
    _
  $region5: #{_ema_update_impl.1} parent=0 // pred_fallthru
    _
  // Predicated region
  $region6: #{_ema_update_impl.1} parent=0 // pred_check
    _
  $region7: #{_ema_update_impl.1} parent=0 // pred_check_branch
    %10 = sbr.rel (0) target = $region9
  $region8: #{_ema_update_impl.1} parent=0 // pred_region
    _
  $region9: #{_ema_update_impl.1} parent=0 // pred_fallthru
    _
  %v11 = vld [vmem:[%s0] sm:$0xff]
  %v12 = vld [vmem:[%s0 + $0x8] sm:$0xff]
  %v13 = vld [vmem:[%s1] sm:$0xff]
  %v14 = vld [vmem:[%s1 + $0x8] sm:$0xff]
  %v15 = vmul.f32 %v13, 0.9
  %v16 = vmul.f32 %v14, 0.9
  %v17 = vmul.f32 %v11, 0.1
  %v18 = vmul.f32 %v12, 0.1
  %v19 = vadd.f32 %v15, %v17
  %v20 = vadd.f32 %v16, %v18
  %21 = vst [vmem:[%s2] sm:$0xff] %v19
  %22 = vst [vmem:[%s2 + $0x8] sm:$0xff] %v20
  // Predicated region
  $region10: #{_ema_update_impl.1} parent=0 // pred_check
    _
  $region11: #{_ema_update_impl.1} parent=0 // pred_check_branch
    %24 = sbr.rel (0) target = $region13
  $region12: #{_ema_update_impl.1} parent=0 // pred_region
    _
  $region13: #{_ema_update_impl.1} parent=0 // pred_fallthru
    _
  // Predicated region
  $region14: #{_ema_update_impl.1} parent=0 // pred_check
    _
  $region15: #{_ema_update_impl.1} parent=0 // pred_check_branch
    %26 = sbr.rel (0) target = $region17
  $region16: #{_ema_update_impl.1} parent=0 // pred_region
    _
  $region17: #{_ema_update_impl.1} parent=0 // pred_fallthru
    _

</llo_original>
